<compile_context>
chip_gen: v6e
topology: v6e:2x2x1
jax: 0.10.0
libtpu: 0.0.40
codegen_flags: <defaults>
</compile_context>

<pallas_src>
import functools

import jax
import jax.numpy as jnp
from jax.experimental import pallas as pl
from jax.experimental.pallas import tpu as pltpu

_MAX_HW_TILE = 16 * 1024               # lane-tile cap; >=~2K lanes is already at roofline
_TILE_TARGET_BYTES = 2 * 1024 * 1024   # aim for >= 2 MiB of activation/out bytes per step
_MAX_BN = 8                            # cap on batch rows folded per block (static unroll)


def _round_up(x, m):
    return ((x + m - 1) // m) * m


def _cdiv(a, b):
    return (a + b - 1) // b


def _vmem_budgets():
    """(vmem_limit_bytes, tile_budget_bytes), generation-aware."""
    cap = 64 * 1024 * 1024             # conservative default = v7x per-TC VMEM
    try:
        info = pltpu.get_tpu_info()
        cap = int(getattr(info, "vmem_capacity_bytes", cap) or cap)
    except Exception:
        pass
    return int(0.75 * cap), int(0.5 * cap)


_VMEM_LIMIT_BYTES, _TILE_BUDGET_BYTES = _vmem_budgets()


def _choose_hw_tile(c_in, c_out, hw, x_item, o_item, tile_budget):
    """Largest lane-dense HW tile whose double-buffered x/out tiles fit the budget."""
    if hw <= 128:
        return hw                                    # full (small) last dim is legal
    per_col = 2 * (c_in * x_item + c_out * o_item)   # x + out, double-buffered, per lane column
    thw = (tile_budget // max(per_col, 1)) // 128 * 128
    thw = max(128, min(thw, _MAX_HW_TILE))
    if thw >= hw:
        return hw                                    # single full-extent tile
    # balance tiles so there is no near-empty trailing sliver
    n_hw = _cdiv(hw, thw)
    thw = _round_up(_cdiv(hw, n_hw), 128)
    return hw if thw >= hw else thw


def _pick_bn(n, per_batch_bytes, tile_budget):
    """Fold batch rows into one block until the per-step tile reaches ~2 MiB."""
    best = 1
    for bn in range(1, min(n, _MAX_BN) + 1):
        if n % bn:                                   # keep exact blocks (no ragged batch)
            continue
        if 2 * per_batch_bytes * bn > tile_budget:
            break
        best = bn
        if per_batch_bytes * bn >= _TILE_TARGET_BYTES:
            break
    return best


def _choose_tiling(n, c_in, c_out, hw, x_item, o_item, tile_budget):
    thw = _choose_hw_tile(c_in, c_out, hw, x_item, o_item, tile_budget)
    per_batch = (c_in * x_item + c_out * o_item) * thw
    bn = _pick_bn(n, per_batch, tile_budget)
    # v7x has 2 TensorCores: make sure a "parallel" grid axis has >= 2 steps.
    if _cdiv(n, bn) * _cdiv(hw, thw) < 2:
        if n >= 2:
            for cand in range(min(bn, n // 2), 0, -1):
                if n % cand == 0:
                    bn = cand
                    break
        elif hw > 128:
            thw = min(thw, _round_up(_cdiv(hw, 2), 128))
    return bn, thw


def _head_kernel(x_ref, w_ref, b_ref, o_ref, *, bn, precision):
    # x_ref: (bn, C, thw)  w_ref: (Cout, C)  b_ref: (Cout, 1)  o_ref: (bn, Cout, thw)
    w = w_ref[...]
    b = b_ref[...]
    for i in range(bn):                              # static unroll, bn <= _MAX_BN
        acc = jnp.dot(w, x_ref[i], preferred_element_type=jnp.float32,
                      precision=precision)
        o_ref[i] = (acc + b).astype(o_ref.dtype)


@functools.partial(jax.jit, static_argnames=("bn", "thw", "compute_dtype"))
def _pred_1x1(x_ncm, w_kc, b_k1, *, bn, thw, compute_dtype):
    """1x1 conv in native NCHW layout: (N, C, HW) -> (N, Cout, HW)."""
    N, C, HW = x_ncm.shape
    Cout = w_kc.shape[0]
    out_dtype = x_ncm.dtype

    if compute_dtype is not None and x_ncm.dtype != jnp.dtype(compute_dtype):
        # Memory-bound: halve the bytes of the dominant C*HW read.  Accumulation
        # below stays f32, bias is added in f32, output keeps the input dtype.
        x_in = x_ncm.astype(compute_dtype)
        w_in = w_kc.astype(compute_dtype)
        precision = None
    else:
        x_in, w_in = x_ncm, w_kc
        # f32 path: default MXU precision truncates f32 to one bf16 pass.
        precision = (jax.lax.Precision.HIGHEST
                     if x_ncm.dtype == jnp.float32 else None)

    grid = (_cdiv(N, bn), _cdiv(HW, thw))

    flops = 2 * N * Cout * C * HW
    bytes_accessed = (
        x_in.size * x_in.dtype.itemsize
        + w_in.size * w_in.dtype.itemsize
        + b_k1.size * b_k1.dtype.itemsize
        + N * Cout * HW * jnp.dtype(out_dtype).itemsize
    )

    kernel = functools.partial(_head_kernel, bn=bn, precision=precision)

    return pl.pallas_call(
        kernel,
        out_shape=jax.ShapeDtypeStruct((N, Cout, HW), out_dtype),
        grid_spec=pltpu.PrefetchScalarGridSpec(
            num_scalar_prefetch=0,
            grid=grid,
            in_specs=[
                # activations: bn batch rows, full C, one HW tile
                pl.BlockSpec((bn, C, thw), lambda nb, j: (nb, 0, j)),
                # weight / bias: resident (same block every step)
                pl.BlockSpec((Cout, C), lambda nb, j: (0, 0)),
                pl.BlockSpec((Cout, 1), lambda nb, j: (0, 0)),
            ],
            out_specs=pl.BlockSpec((bn, Cout, thw), lambda nb, j: (nb, 0, j)),
        ),
        compiler_params=pltpu.CompilerParams(
            dimension_semantics=("parallel", "parallel"),
            vmem_limit_bytes=_VMEM_LIMIT_BYTES,
        ),
        cost_estimate=pl.CostEstimate(
            flops=flops, transcendentals=0, bytes_accessed=bytes_accessed),
    )(x_in, w_in, b_k1)


class Yolov1HeadPallas:
    """JAX/Pallas equivalent of the PyTorch Yolov1Head module."""

    def __init__(self, inplanes, num_classes, key, compute_dtype=jnp.bfloat16):
        self.num_classes = num_classes
        self.out_channels = 1 + num_classes + 4
        self.compute_dtype = compute_dtype
        kw, kb = jax.random.split(key)
        # nn.Conv2d weight is (out_channels, inplanes, 1, 1); store as (Cout, C).
        bound = 1.0 / (inplanes ** 0.5)   # matches PyTorch default conv init range
        self.w_kc = jax.random.uniform(
            kw, (self.out_channels, inplanes), jnp.float32, -bound, bound)
        self.b_k1 = jax.random.uniform(
            kb, (self.out_channels, 1), jnp.float32, -bound, bound)

    def __call__(self, x):
        feat = x["feats"]                            # NCHW, like PyTorch
        N, C, H, W = feat.shape
        HW = H * W
        x_ncm = feat.reshape(N, C, HW)               # contiguous view, no copy
        x_item = (jnp.dtype(self.compute_dtype).itemsize
                  if self.compute_dtype is not None else feat.dtype.itemsize)
        bn, thw = _choose_tiling(N, C, self.out_channels, HW,
                                 x_item, feat.dtype.itemsize, _TILE_BUDGET_BYTES)
        out_ncm = _pred_1x1(x_ncm, self.w_kc, self.b_k1,
                            bn=bn, thw=thw, compute_dtype=self.compute_dtype)
        out = out_ncm.reshape(N, self.out_channels, H, W)
        x.update({"feats": out})
        return x


if __name__ == "__main__":
    key = jax.random.PRNGKey(0)
    k_in, k_param = jax.random.split(key)

    batch, inplanes, H, W = 2, 4, 16, 16
    num_classes = 3                                  # out_channels = 1 + 3 + 4 = 8

    feats = jax.random.normal(k_in, (batch, inplanes, H, W), jnp.float32)
    head = Yolov1HeadPallas(inplanes, num_classes, k_param)

    result = head({"feats": feats})
    out = jax.block_until_ready(result["feats"])

    assert out.shape == (batch, head.out_channels, H, W)
    assert out.dtype == feats.dtype

    # Reference for exactly what the kernel computes: bf16-rounded inputs,
    # f32 accumulation, f32 bias add.
    f_bf = feats.astype(jnp.bfloat16).astype(jnp.float32)
    w_bf = head.w_kc.astype(jnp.bfloat16).astype(jnp.float32)
    ref = (jnp.einsum("nchw,kc->nkhw", f_bf, w_bf,
                      precision=jax.lax.Precision.HIGHEST)
           + head.b_k1.reshape(1, -1, 1, 1))
    assert jnp.allclose(out, ref, atol=1e-4, rtol=1e-4), "mismatch vs reference"

    # Loose check against the full-f32 conv (documents the bf16 input rounding
    # of the fast path; set compute_dtype=None for bit-close f32 semantics).
    ref_f32 = (jnp.einsum("nchw,kc->nkhw", feats, head.w_kc,
                          precision=jax.lax.Precision.HIGHEST)
               + head.b_k1.reshape(1, -1, 1, 1))
    assert jnp.allclose(out, ref_f32, atol=1e-1), "too far from f32 reference"

    print("KERNEL_OK")
</pallas_src>

<mosaic_0001>
module attributes {stable_mosaic.version = 11 : i64} {
  func.func @_head_kernel(%arg0: i32, %arg1: i32, %arg2: memref<1x4x256xbf16, #tpu.memory_space<vmem>>, %arg3: memref<8x4xbf16, #tpu.memory_space<vmem>>, %arg4: memref<8x1xf32, #tpu.memory_space<vmem>>, %arg5: memref<1x8x256xf32, #tpu.memory_space<vmem>>) attributes {dimension_semantics = [#tpu.dimension_semantics<parallel>, #tpu.dimension_semantics<parallel>], iteration_bounds = array<i64: 2, 1>, scalar_prefetch = 0 : i64, scratch_operands = 0 : i64, tpu.core_type = #tpu.core_type<tc>, window_params = [{transform_indices = @transform_0, window_bounds = array<i64: 1, 4, 256>}, {pipeline_mode = #tpu.pipeline_mode<synchronous>, transform_indices = @transform_1, window_bounds = array<i64: 8, 4>}, {pipeline_mode = #tpu.pipeline_mode<synchronous>, transform_indices = @transform_2, window_bounds = array<i64: 8, 1>}, {transform_indices = @transform_3, window_bounds = array<i64: 1, 8, 256>}]} {
    %c0 = arith.constant 0 : index
    %c0_0 = arith.constant 0 : index
    %0 = vector.load %arg3[%c0, %c0_0] : memref<8x4xbf16, #tpu.memory_space<vmem>>, vector<8x4xbf16>
    %c0_1 = arith.constant 0 : index
    %c0_2 = arith.constant 0 : index
    %1 = vector.load %arg4[%c0_1, %c0_2] : memref<8x1xf32, #tpu.memory_space<vmem>>, vector<8x1xf32>
    %c0_3 = arith.constant 0 : index
    %c0_4 = arith.constant 0 : index
    %c0_5 = arith.constant 0 : index
    %2 = vector.load %arg2[%c0_3, %c0_4, %c0_5] : memref<1x4x256xbf16, #tpu.memory_space<vmem>>, vector<1x4x256xbf16>
    %3 = vector.shape_cast %2 : vector<1x4x256xbf16> to vector<4x256xbf16>
    %cst = arith.constant dense<0.000000e+00> : vector<8x256xf32>
    %4 = tpu.matmul %0, %3, %cst {dimension_numbers = #tpu.dot_dimension_numbers<[1], [0], [0], [1], [0, 0, 1, 1], [], []>} : vector<8x4xbf16>, vector<4x256xbf16>, vector<8x256xf32> -> vector<8x256xf32>
    %5 = vector.broadcast %1 : vector<8x1xf32> to vector<8x256xf32>
    %6 = arith.addf %4, %5 : vector<8x256xf32>
    %c0_6 = arith.constant 0 : index
    %c0_7 = arith.constant 0 : index
    %c0_8 = arith.constant 0 : index
    %7 = vector.load %arg5[%c0_6, %c0_7, %c0_8] : memref<1x8x256xf32, #tpu.memory_space<vmem>>, vector<1x8x256xf32>
    %8 = vector.shape_cast %7 : vector<1x8x256xf32> to vector<8x256xf32>
    %9 = vector.shape_cast %6 : vector<8x256xf32> to vector<1x8x256xf32>
    tpu.vector_store %arg5[%c0_6, %c0_7, %c0_8], %9 {strides = array<i32>} : memref<1x8x256xf32, #tpu.memory_space<vmem>>, vector<1x8x256xf32>,
    return
  }
  func.func @transform_0(%arg0: i32, %arg1: i32) -> (i32, i32, i32) {
    %c0_i32 = arith.constant 0 : i32
    %c0_i32_0 = arith.constant 0 : i32
    return %arg0, %c0_i32, %arg1 : i32, i32, i32
  }
  func.func @transform_1(%arg0: i32, %arg1: i32) -> (i32, i32) {
    %c0_i32 = arith.constant 0 : i32
    %c0_i32_0 = arith.constant 0 : i32
    %c0_i32_1 = arith.constant 0 : i32
    return %c0_i32, %c0_i32_0 : i32, i32
  }
  func.func @transform_2(%arg0: i32, %arg1: i32) -> (i32, i32) {
    %c0_i32 = arith.constant 0 : i32
    %c0_i32_0 = arith.constant 0 : i32
    %c0_i32_1 = arith.constant 0 : i32
    return %c0_i32, %c0_i32_0 : i32, i32
  }
  func.func @transform_3(%arg0: i32, %arg1: i32) -> (i32, i32, i32) {
    %c0_i32 = arith.constant 0 : i32
    %c0_i32_0 = arith.constant 0 : i32
    return %arg0, %c0_i32, %arg1 : i32, i32, i32
  }
}

</mosaic_0001>

<llo_original>
// kernel: _pred_1x1.1
$region0: #{_pred_1x1.1}
  #allocation0 [shape = 'u32[]', space=smem, size = 0x4, offset = 0x4, fixed_abs, tag = 'smem constant byte address 0x4 - core index']
  #allocation1 [shape = 'u32[144,128]{1,0:T(1,128)}', space=vmem, size = 0x12000, scoped, tag = 'internal scratch']
  %s0 = inlined_call_operand.vmem [shape: bf16[2,4,256], index: 0, kind: input, shape index: {}]
  %s1 = inlined_call_operand.vmem [shape: bf16[8,4], index: 1, kind: input, shape index: {}]
  %s2 = inlined_call_operand.vmem [shape: f32[8,1], index: 2, kind: input, shape index: {}]
  %s3 = inlined_call_operand.hbm [shape: f32[2,8,256], index: 3, kind: output, shape index: {}]
  %s4 = sld [smem:[#allocation0]]
  $region45: #{_pred_1x1.1} parent=0
    _
  %s6 = ssub.s32 1, %s4
  %s7 = scalar_select 0, %s6, %s4
  $region1: #{_pred_1x1.1} parent=0
    #allocation2 [shape = 'u8[16384]{0}', space=vmem, size = 0x4000, scoped, tag = 'output window, operand 0']
    #allocation3 [shape = 's32[2]{0}', space=sflag, size = 0x8, scoped, tag = 'scoped memory for _pred_1x1.1']
    %8 = vsyncpa [#allocation3], 0
    %s9 = scalar_lea.sflag [#allocation3], 1
    %10 = vsyncpa %s9, 0
    loop: start=0, step=1, limit=4
    $region2: #{_pred_1x1.1} parent=1 // loop_pre_header
      _
    $region3: #{_pred_1x1.1} parent=1 // loop_header
      %s12 = sphi 0, %s16
      %p13 = scmp.ge.s32.totalorder %s12, 4
      %s19 = sphi 0, %s31
      %s20 = sphi 0, %s27
      %s21 = sphi 0, %s19
      %s22 = sphi 0, %s20
      %s23 = sphi 0, %s21
      %s24 = sphi 0, %s22
      %s36 = sphi 0, %s38
      %s39 = sphi 0, %s36
      %s40 = sphi 0, %s39
      %s56 = sphi 0, %s40
      %s60 = sphi 0, %s60
      %s62 = sphi 0, %s60
      %s63 = sphi 0, %s62
      %s77 = sphi 0, %s63
      %s81 = sphi 0, %s81
      %s83 = sphi 0, %s81
      %s84 = sphi 0, %s83
      %s98 = sphi 0, %s84
      %s106 = sphi 0, %s108
      %s109 = sphi 0, %s106
      %s110 = sphi 0, %s109
      %s126 = sphi 0, %s110
    $region4: #{_pred_1x1.1} parent=1 // loop_header_branch
      %15 = sbr.rel (%p13) target = $region8
    $region5: #{_pred_1x1.1} parent=1 // loop_body
      %s17 = ssub.s32 %s12, 1
      %s18 = ssub.s32 %s12, 2
      %s25 = sadd.s32 1, %s20
      %p26 = scmp.ge.s32.totalorder %s25, 1
      %s27 = scalar_select %p26, 0, %s25
      %s28 = sadd.s32 1, %s19
      %s29 = scalar_select %p26, %s28, %s19
      %p30 = scmp.ge.s32.totalorder %s29, 2
      %s31 = scalar_select %p30, 0, %s29
      %s32 = ssub.s32 %s19, %s31
      %s33 = ssub.s32 %s20, %s27
      %s34 = sor.u32 %s32, %s33
      %p35 = scmp.eq.s32.totalorder %s34, 0
      %s37 = sadd.s32 %s36, 1
      %s38 = scalar_select %p35, %s36, %s37
      %p41 = pneg %p35
      %p42 = scmp.eq.s32.totalorder %s12, 1
      %p43 = por %p41, %p42
      %p44 = scmp.ne.s32.totalorder %s36, %s39
      %p45 = scmp.eq.s32.totalorder %s12, 0
      %p46 = por %p44, %p45
      %p47 = scmp.ne.s32.totalorder %s36, %s39
      %p48 = scmp.eq.s32.totalorder %s17, 1
      %p49 = por %p47, %p48
      %p50 = scmp.ne.s32.totalorder %s39, %s40
      %p51 = scmp.eq.s32.totalorder %s17, 0
      %p52 = por %p50, %p51
      %p53 = scmp.ne.s32.totalorder %s39, %s40
      %p54 = scmp.eq.s32.totalorder %s18, 1
      %p55 = por %p53, %p54
      %p57 = scmp.ne.s32.totalorder %s40, %s56
      %p58 = scmp.eq.s32.totalorder %s18, 0
      %p59 = por %p57, %p58
      %s61 = sadd.s32 %s60, 1
      %p64 = scmp.eq.s32.totalorder %s12, 1
      %p65 = scmp.ne.s32.totalorder %s60, %s62
      %p66 = scmp.eq.s32.totalorder %s12, 0
      %p67 = por %p65, %p66
      %p68 = scmp.ne.s32.totalorder %s60, %s62
      %p69 = scmp.eq.s32.totalorder %s17, 1
      %p70 = por %p68, %p69
      %p71 = scmp.ne.s32.totalorder %s62, %s63
      %p72 = scmp.eq.s32.totalorder %s17, 0
      %p73 = por %p71, %p72
      %p74 = scmp.ne.s32.totalorder %s62, %s63
      %p75 = scmp.eq.s32.totalorder %s18, 1
      %p76 = por %p74, %p75
      %p78 = scmp.ne.s32.totalorder %s63, %s77
      %p79 = scmp.eq.s32.totalorder %s18, 0
      %p80 = por %p78, %p79
      %s82 = sadd.s32 %s81, 1
      %p85 = scmp.eq.s32.totalorder %s12, 1
      %p86 = scmp.ne.s32.totalorder %s81, %s83
      %p87 = scmp.eq.s32.totalorder %s12, 0
      %p88 = por %p86, %p87
      %p89 = scmp.ne.s32.totalorder %s81, %s83
      %p90 = scmp.eq.s32.totalorder %s17, 1
      %p91 = por %p89, %p90
      %p92 = scmp.ne.s32.totalorder %s83, %s84
      %p93 = scmp.eq.s32.totalorder %s17, 0
      %p94 = por %p92, %p93
      %p95 = scmp.ne.s32.totalorder %s83, %s84
      %p96 = scmp.eq.s32.totalorder %s18, 1
      %p97 = por %p95, %p96
      %p99 = scmp.ne.s32.totalorder %s84, %s98
      %p100 = scmp.eq.s32.totalorder %s18, 0
      %p101 = por %p99, %p100
      %s102 = ssub.s32 %s19, %s31
      %s103 = ssub.s32 %s20, %s27
      %s104 = sor.u32 %s102, %s103
      %p105 = scmp.eq.s32.totalorder %s104, 0
      %s107 = sadd.s32 %s106, 1
      %s108 = scalar_select %p105, %s106, %s107
      %p111 = pneg %p105
      %p112 = scmp.eq.s32.totalorder %s12, 1
      %p113 = por %p111, %p112
      %p114 = scmp.ne.s32.totalorder %s106, %s109
      %p115 = scmp.eq.s32.totalorder %s12, 0
      %p116 = por %p114, %p115
      %p117 = scmp.ne.s32.totalorder %s106, %s109
      %p118 = scmp.eq.s32.totalorder %s17, 1
      %p119 = por %p117, %p118
      %p120 = scmp.ne.s32.totalorder %s109, %s110
      %p121 = scmp.eq.s32.totalorder %s17, 0
      %p122 = por %p120, %p121
      %p123 = scmp.ne.s32.totalorder %s109, %s110
      %p124 = scmp.eq.s32.totalorder %s18, 1
      %p125 = por %p123, %p124
      %p127 = scmp.ne.s32.totalorder %s110, %s126
      %p128 = scmp.eq.s32.totalorder %s18, 0
      %p129 = por %p127, %p128
      %p130 = scmp.le.s32.totalorder 1, %s12
      %p131 = scmp.lt.s32.totalorder %s12, 3
      %p132 = pnand %p130, %p131
      %p133 = pneg %p132
      // Predicated region
      $region9: #{_pred_1x1.1} parent=5 // pred_check
        _
      $region10: #{_pred_1x1.1} parent=5 // pred_check_branch
        %135 = sbr.rel (%p132) target = $region12
      $region11: #{_pred_1x1.1} parent=5 // pred_region
        %s136 = ssub.s32 %s12, 1
        // Predicated region
        $region13: #{_pred_1x1.1} parent=11 // pred_check
          %p137 = pneg %p73
        $region14: #{_pred_1x1.1} parent=11 // pred_check_branch
          %139 = sbr.rel (%p137) target = $region16
        $region15: #{_pred_1x1.1} parent=11 // pred_region
          _
        $region16: #{_pred_1x1.1} parent=11 // pred_fallthru
          _
        // Predicated region
        $region17: #{_pred_1x1.1} parent=11 // pred_check
          %p140 = pneg %p94
        $region18: #{_pred_1x1.1} parent=11 // pred_check_branch
          %142 = sbr.rel (%p140) target = $region20
        $region19: #{_pred_1x1.1} parent=11 // pred_region
          _
        $region20: #{_pred_1x1.1} parent=11 // pred_fallthru
          _
      $region12: #{_pred_1x1.1} parent=5 // pred_fallthru
        _
      %p143 = scmp.lt.s32.totalorder %s12, 2
      // Predicated region
      $region21: #{_pred_1x1.1} parent=5 // pred_check
        %p144 = pneg %p143
      $region22: #{_pred_1x1.1} parent=5 // pred_check_branch
        %146 = sbr.rel (%p144) target = $region24
      $region23: #{_pred_1x1.1} parent=5 // pred_region
        // Predicated region
        $region25: #{_pred_1x1.1} parent=23 // pred_check
          %p147 = pneg %p46
        $region26: #{_pred_1x1.1} parent=23 // pred_check_branch
          %149 = sbr.rel (%p147) target = $region28
        $region27: #{_pred_1x1.1} parent=23 // pred_region
          %s150 = smul.u32 2, %s20
          %p151 = scmp.lt.s32.totalorder %s19, 1
          %s152 = scalar_select %p151, %s19, 1
          %p153 = scmp.lt.s32.totalorder %s150, 1
          %s154 = scalar_select %p153, %s150, 1
          %s155 = smul.addr %s152, 2
          %s156 = sadd.s32 %s154, %s155
          %s157 = smul.addr %s156, 2
          %s158 = scalar_lea.vmem %s0, %s157
          %s159 = smul.u32 2, %s20
        $region28: #{_pred_1x1.1} parent=23 // pred_fallthru
          _
      $region24: #{_pred_1x1.1} parent=5 // pred_fallthru
        _
      %p160 = scmp.le.s32.totalorder 1, %s12
      %p161 = scmp.lt.s32.totalorder %s12, 3
      %p162 = pnand %p160, %p161
      %p163 = pneg %p162
      // Predicated region
      $region29: #{_pred_1x1.1} parent=5 // pred_check
        _
      $region30: #{_pred_1x1.1} parent=5 // pred_check_branch
        %165 = sbr.rel (%p162) target = $region32
      $region31: #{_pred_1x1.1} parent=5 // pred_region
        %s166 = ssub.s32 %s12, 1
        %s167 = smul.u32 2, %s22
        %p168 = scmp.lt.s32.totalorder %s21, 1
        %s169 = scalar_select %p168, %s21, 1
        %p170 = scmp.lt.s32.totalorder %s167, 1
        %s171 = scalar_select %p170, %s167, 1
        %s172 = smul.addr %s169, 2
        %s173 = sadd.s32 %s171, %s172
        %s174 = smul.addr %s173, 2
        %s175 = scalar_lea.vmem %s0, %s174
        %p176 = pneg %p52
        %p177 = pneg %p49
        %p178 = pneg %p73
        %p179 = pneg %p70
        %p180 = pneg %p94
        %p181 = pneg %p91
        %p182 = pneg %p122
        %p183 = pneg %p119
        %s184 = sand.u32 %s109, 1
        %s185 = scalar_lea.sflag [#allocation3], %s184
        %s186 = sand.u32 %s109, 1
        %s187 = smul.addr %s186, 16
        %s188 = scalar_lea.vmem [#allocation2], %s187
        %s189 = smul.u32 2, %s22
        %p190 = scmp.lt.s32.totalorder %s21, 1
        %s191 = scalar_select %p190, %s21, 1
        %p192 = scmp.lt.s32.totalorder %s189, 1
        %s193 = scalar_select %p192, %s189, 1
        %s194 = smul.addr %s191, 2
        %s195 = sadd.s32 %s193, %s194
        %s196 = smul.addr %s195, 2
        %s197 = scalar_lea.vmem %s0, %s196
        %s198 = smul.u32 2, %s22
        %s199 = smul.u32 2, %s22
        %v201 = vld [vmem:[%s1] sm:$0xf]
        %v202 = vld [vmem:[%s2] sm:$0xff]
        %v203 = vld [vmem:[%s197] sm:$0xf]
        %205 = vset.pattern.permute.xlu0 0
        %206 = vperm.xlu0 %205, %v202
        %v207 = vpop.permute.xlu0 %206
        %v211 = vunpack.c.l.s4 1983009808
        %v212 = vunpack.c.0.s8 %v211
        %v213 = vlaneseq
        %v214 = vshrl.u32 %v213, 7
        %v215 = vsub.s32 %v212, %v214
        %v216 = vrot.slane %v203, %v215
        %v217 = vcombine.high %v216, %v216
        %vm218 = vcmask 31744
        %v220 = vsel %vm218, %v201, 0
        %vm222 = vcmask 1041408
        %v224 = vsel %vm222, %v216, 0
        %v227 = vsel %vm222, %v217, 0
        %229 = vmatprep.subr.bf16.mxu0 0
        %230 = vmatpush1.bf16.msra.mxu0 0
        %231 = vmatprep.subr.bf16.mxu0 0
        %232 = vmatpush1.bf16.msra.mxu0 0
        %233 = vmatprep.subr.bf16.mxu0 0
        %234 = vmatpush1.bf16.msra.mxu0 0
        %235 = vmatprep.subr.bf16.mxu0 0
        %236 = vmatpush1.bf16.msra.mxu0 0
        %237 = vmatprep.subr.bf16.mxu0 0
        %238 = vmatpush1.bf16.msra.mxu0 0
        %239 = vmatprep.subr.bf16.mxu0 0
        %240 = vmatpush1.bf16.msra.mxu0 0
        %241 = vmatprep.subr.bf16.mxu0 0
        %242 = vmatpush1.bf16.msra.mxu0 0
        %243 = vmatprep.subr.bf16.mxu0 %v227
        %244 = vmatpush1.bf16.msra.mxu0 %v224
        %245 = vmatprep.subr.bf16.mxu0 0
        %246 = vmatpush2.bf16.msra.mxu0 0
        %247 = vmatprep.subr.bf16.mxu0 0
        %248 = vmatpush2.bf16.msra.mxu0 0
        %249 = vmatprep.subr.bf16.mxu0 0
        %250 = vmatpush2.bf16.msra.mxu0 0
        %251 = vmatprep.subr.bf16.mxu0 0
        %252 = vmatpush2.bf16.msra.mxu0 0
        %253 = vmatprep.subr.bf16.mxu0 0
        %254 = vmatpush2.bf16.msra.mxu0 0
        %255 = vmatprep.subr.bf16.mxu0 0
        %256 = vmatpush2.bf16.msra.mxu0 0
        %257 = vmatprep.subr.bf16.mxu0 0
        %258 = vmatpush2.bf16.msra.mxu0 0
        %259 = vmatprep.subr.bf16.mxu0 0
        %260 = vmatpush2.bf16.msra.mxu0 0
        %261 = vmatprep.mubr.bf16.mxu0 0
        %262 = vmatmul.mubr.bf16.gmra.mxu0 %v220
        %v263 = vpop.f32.mrf.mxu0
        %v264 = vadd.f32 %v207, %v263
        %v265 = vpop.f32.mrf.mxu0
        %v266 = vadd.f32 %v207, %v265
        %v267 = vpop.f32.mrf.mxu0
        %v268 = vpop.f32.mrf.mxu0
        %269 = vdwg.mxu0
        %270 = vst [vmem:[%s188] sm:$0xff] %v264
        %271 = vst [vmem:[%s188 + $0x8] sm:$0xff] %v266
        %s272 = sand.u32 %s109, 1
        %s273 = scalar_lea.sflag [#allocation3], %s272
        %s274 = sand.u32 %s109, 1
        %s275 = smul.addr %s274, 16
        %s276 = scalar_lea.vmem [#allocation2], %s275
        // Predicated region
        $region33: #{_pred_1x1.1} parent=31 // pred_check
          %p277 = pneg %p119
        $region34: #{_pred_1x1.1} parent=31 // pred_check_branch
          %279 = sbr.rel (%p277) target = $region36
        $region35: #{_pred_1x1.1} parent=31 // pred_region
          %s280 = smul.u32 2, %s22
          %s282 = ssub.s32 256, 256
          %283 = vsyncadd %s273, %s282
          %s284 = smul.addr %s21, 2
          %s285 = sadd.s32 %s280, %s284
          %s286 = smul.addr %s285, 128
          %s287 = scalar_lea.hbm %s3, %s286
          %s289 = sshll.u32 %s276, 4
          %s290 = int_to_ptr.vmem [resolvable:$true] %s289
          %292 = dma.vmem_to_hbm [thread:$0]  %s290, 256, %s287, %s273
        $region36: #{_pred_1x1.1} parent=31 // pred_fallthru
          _
      $region32: #{_pred_1x1.1} parent=5 // pred_fallthru
        _
      %p293 = scmp.le.s32.totalorder 2, %s12
      // Predicated region
      $region37: #{_pred_1x1.1} parent=5 // pred_check
        %p294 = pneg %p293
      $region38: #{_pred_1x1.1} parent=5 // pred_check_branch
        %296 = sbr.rel (%p294) target = $region40
      $region39: #{_pred_1x1.1} parent=5 // pred_region
        %s297 = ssub.s32 %s12, 2
        // Predicated region
        $region41: #{_pred_1x1.1} parent=39 // pred_check
          %p298 = pneg %p125
        $region42: #{_pred_1x1.1} parent=39 // pred_check_branch
          %300 = sbr.rel (%p298) target = $region44
        $region43: #{_pred_1x1.1} parent=39 // pred_region
          %s301 = sand.u32 %s110, 1
          %s302 = scalar_lea.sflag [#allocation3], %s301
          %s303 = sand.u32 %s110, 1
          %s304 = smul.addr %s303, 16
          %s305 = scalar_lea.vmem [#allocation2], %s304
          %306 = dma.done %s302, 256
        $region44: #{_pred_1x1.1} parent=39 // pred_fallthru
          _
      $region40: #{_pred_1x1.1} parent=5 // pred_fallthru
        _
    $region6: #{_pred_1x1.1} parent=1 // loop_footer
      %s16 = sadd.s32 1, %s12
    $region7: #{_pred_1x1.1} parent=1 // loop_footer_branch
      %11 = sbr.rel target = $region3
    $region8: #{_pred_1x1.1} parent=1 // loop_exit
      _
    %307 = vsyncpa [#allocation3], 1
    %s308 = scalar_lea.sflag [#allocation3], 1
    %309 = vsyncpa %s308, 1

</llo_original>
